<compile_context>
chip_gen: v6e
topology: v6e:2x2x1
jax: 0.10.0
libtpu: 0.0.40
codegen_flags: <defaults>
</compile_context>

<pallas_src>
import math

import jax
import jax.numpy as jnp
from jax import lax
from jax.experimental import pallas as pl
from jax.experimental.pallas import tpu as pltpu


def _round_up(x, m):
    return ((x + m - 1) // m) * m


def _largest_divisor_leq(n, k):
    k = max(1, min(n, k))
    for d in range(k, 0, -1):
        if n % d == 0:
            return d
    return 1


def _default_vmem_limit_bytes():
    """Scoped-VMEM limit: ~3/4 of physical VMEM, capped at 96 MiB.

    v5e/v6e (128 MiB physical) -> 96 MiB; v7x (64 MiB physical) -> 48 MiB.
    Falls back to a conservative 48 MiB if the hardware query is unavailable.
    """
    cap = 64 * 1024 * 1024
    try:
        info = pltpu.get_tpu_info()
        cap = int(getattr(info, "vmem_capacity_bytes", cap)) or cap
    except Exception:
        pass
    return int(min(cap * 3 // 4, 96 * 1024 * 1024))


def _make_kernel(chunk):
    """Build the fused softmax-attention kernel.

    `chunk` (static): lane extent of the in-kernel compute sub-slice.  The
    wrapper guarantees it is either >= the block's lane extent (single shot)
    or a multiple of 128 (loop over 128-aligned sub-slices).
    """

    def kernel(cnn_ref, mlp_ref, o_ref):
        T = o_ref.shape[-1]

        def do(start, size):
            # (BN, C, size): channels on sublanes, spatial on lanes.
            mlp = mlp_ref[:, :, pl.ds(start, size)].astype(jnp.float32)
            m = jnp.max(mlp, axis=1, keepdims=True)        # cross-sublane (XLU)
            e = jnp.exp(mlp - m)                           # EUP
            s = jnp.sum(e, axis=1, keepdims=True)          # cross-sublane (XLU)
            inv = 1.0 / s                                  # one divide per lane
            cnn = cnn_ref[:, :, pl.ds(start, size)].astype(jnp.float32)
            # out = out_cnn * softmax(out_mlp) + out_cnn
            o_ref[:, :, pl.ds(start, size)] = (cnn + (cnn * e) * inv).astype(o_ref.dtype)

        if chunk >= T:
            do(0, T)
        else:
            n_full = T // chunk
            rem = T - n_full * chunk

            def body(i, carry):
                do(pl.multiple_of(i * chunk, 128), chunk)
                return carry

            lax.fori_loop(0, n_full, body, 0, unroll=False)
            if rem:
                do(n_full * chunk, rem)

    return kernel


def mlp_attention(out_cnn, out_mlp, *, compute_chunk=2048, vmem_limit_bytes=None):
    """out_cnn, out_mlp: (N, C, *spatial) with identical shapes (NCHW or NCDHW).

    Returns softmax(out_mlp, axis=1) * out_cnn + out_cnn.
    """
    assert out_cnn.shape == out_mlp.shape, "out_cnn and out_mlp must have the same shape"
    assert out_cnn.ndim >= 3, "expected (N, C, *spatial)"
    N, C = out_cnn.shape[:2]
    S = math.prod(out_cnn.shape[2:])
    out_dtype = jnp.result_type(out_cnn.dtype, out_mlp.dtype)

    x_cnn = out_cnn.reshape(N, C, S)
    x_mlp = out_mlp.reshape(N, C, S)

    if vmem_limit_bytes is None:
        vmem_limit_bytes = _default_vmem_limit_bytes()
    # DMA-buffer budget: half of the scoped limit (rest is temporaries,
    # compiler-internal scratch and pipelining headroom).
    budget = max(1 << 20, vmem_limit_bytes // 2)

    compute_chunk = max(128, (compute_chunk // 128) * 128)

    # Honest per-(batch-row, lane) column cost:
    #   3 arrays x 2 pipeline buffers at the widest storage itemsize
    # + ~4 tile-sized f32 temporaries (mlp, e, cnn, result) as an upper bound
    #   (the in-kernel chunk loop usually keeps the live temps much smaller).
    itemsize = max(jnp.dtype(out_cnn.dtype).itemsize,
                   jnp.dtype(out_mlp.dtype).itemsize,
                   jnp.dtype(out_dtype).itemsize)
    col_bytes = C * (6 * itemsize + 4 * 4)
    max_cols = max(128, budget // col_bytes)   # BN * tile lanes allowed

    S_cols = _round_up(S, 128)
    if S_cols <= max_cols:
        # Whole spatial extent fits in one block: fold batch rows into the
        # block so each DMA stays large on small feature maps.
        tile = S
        bn = _largest_divisor_leq(N, max(1, max_cols // S_cols))
    else:
        # Tile the spatial extent only.
        bn = 1
        tile = (max_cols // 128) * 128
        if tile > compute_chunk:
            tile = (tile // compute_chunk) * compute_chunk

    grid_n = pl.cdiv(N, bn)
    grid_s = pl.cdiv(S, tile)

    # Guarantee >=2 grid steps along a parallel axis when possible so both
    # v7x TensorCores get work (harmless elsewhere).
    if grid_n * grid_s == 1:
        if N > 1:
            bn = _largest_divisor_leq(N, N // 2)
            grid_n = pl.cdiv(N, bn)
        elif S > 256:
            tile = _round_up(pl.cdiv(S, 2), 128)
            grid_s = pl.cdiv(S, tile)

    # In-kernel compute sub-slice (decoupled from the DMA tile).
    if tile % 128 == 0 and tile > compute_chunk:
        chunk = compute_chunk
    else:
        chunk = tile

    blk = pl.BlockSpec((bn, C, tile), lambda n, s: (n, 0, s))

    out = pl.pallas_call(
        _make_kernel(chunk),
        out_shape=jax.ShapeDtypeStruct((N, C, S), out_dtype),
        grid_spec=pltpu.PrefetchScalarGridSpec(
            num_scalar_prefetch=0,
            grid=(grid_n, grid_s),
            in_specs=[blk, blk],
            out_specs=blk,
        ),
        compiler_params=pltpu.CompilerParams(
            dimension_semantics=("parallel", "parallel"),
            vmem_limit_bytes=int(vmem_limit_bytes),
        ),
    )(x_cnn, x_mlp)

    return out.reshape(out_cnn.shape)


def _reference(out_cnn, out_mlp):
    # Pure-JAX reference: F.softmax(out_mlp) on 4-D/5-D input -> softmax over dim=1.
    a = jax.nn.softmax(out_mlp.astype(jnp.float32), axis=1)
    return out_cnn.astype(jnp.float32) * a + out_cnn.astype(jnp.float32)


if __name__ == "__main__":
    key = jax.random.PRNGKey(0)
    k1, k2, k3, k4, k5, k6, k7, k8 = jax.random.split(key, 8)

    # Typical small NCHW feature map.
    shape = (2, 8, 64, 64)
    out_cnn = jax.random.normal(k1, shape, dtype=jnp.float32)
    out_mlp = jax.random.normal(k2, shape, dtype=jnp.float32)
    y = jax.block_until_ready(mlp_attention(out_cnn, out_mlp))
    assert y.shape == shape
    assert jnp.allclose(y.astype(jnp.float32), _reference(out_cnn, out_mlp),
                        atol=1e-5, rtol=1e-5)

    # Non-128-aligned spatial extent (exercises block == full array last dim).
    shape2 = (2, 8, 20, 20)
    c2 = jax.random.normal(k3, shape2, dtype=jnp.float32)
    m2 = jax.random.normal(k4, shape2, dtype=jnp.float32)
    y2 = jax.block_until_ready(mlp_attention(c2, m2))
    assert jnp.allclose(y2.astype(jnp.float32), _reference(c2, m2),
                        atol=1e-5, rtol=1e-5)

    # 5-D input, N=1 -> exercises the spatial split into 2 parallel blocks with
    # a partial (masked) final block.
    shape3 = (1, 4, 4, 12, 12)
    c3 = jax.random.normal(k5, shape3, dtype=jnp.float32)
    m3 = jax.random.normal(k6, shape3, dtype=jnp.float32)
    y3 = jax.block_until_ready(mlp_attention(c3, m3))
    assert jnp.allclose(y3.astype(jnp.float32), _reference(c3, m3),
                        atol=1e-5, rtol=1e-5)

    # bf16 storage (half the HBM traffic), f32 compute in-kernel.
    shape4 = (1, 4, 16, 16)
    c4 = jax.random.normal(k7, shape4, dtype=jnp.bfloat16)
    m4 = jax.random.normal(k8, shape4, dtype=jnp.bfloat16)
    y4 = jax.block_until_ready(mlp_attention(c4, m4))
    ref4 = _reference(c4, m4).astype(jnp.bfloat16).astype(jnp.float32)
    assert jnp.allclose(y4.astype(jnp.float32), ref4, atol=2e-2, rtol=2e-2)

    print("KERNEL_OK")
</pallas_src>

<mosaic_0001>
module attributes {stable_mosaic.version = 11 : i64} {
  func.func @kernel(%arg0: i32, %arg1: i32, %arg2: memref<1x8x4096xf32, #tpu.memory_space<vmem>>, %arg3: memref<1x8x4096xf32, #tpu.memory_space<vmem>>, %arg4: memref<1x8x4096xf32, #tpu.memory_space<vmem>>) attributes {dimension_semantics = [#tpu.dimension_semantics<parallel>, #tpu.dimension_semantics<parallel>], iteration_bounds = array<i64: 2, 1>, scalar_prefetch = 0 : i64, scratch_operands = 0 : i64, tpu.core_type = #tpu.core_type<tc>, window_params = [{transform_indices = @transform_0, window_bounds = array<i64: 1, 8, 4096>}, {transform_indices = @transform_1, window_bounds = array<i64: 1, 8, 4096>}, {transform_indices = @transform_2, window_bounds = array<i64: 1, 8, 4096>}]} {
    %c0_i32 = arith.constant 0 : i32
    %c2_i32 = arith.constant 2 : i32
    %0 = arith.addi %c0_i32, %c2_i32 : i32
    %c1_i32 = arith.constant 1 : i32
    scf.for %arg5 = %c0_i32 to %0 step %c1_i32  : i32 {
      %c2048_i32 = arith.constant 2048 : i32
      %1 = arith.muli %arg5, %c2048_i32 : i32
      %2 = tpu.assume_multiple %1, 128 : i32
      %c0 = arith.constant 0 : index
      %c0_1 = arith.constant 0 : index
      %3 = arith.index_cast %2 : i32 to index
      %4 = vector.load %arg3[%c0, %c0_1, %3] : memref<1x8x4096xf32, #tpu.memory_space<vmem>>, vector<1x8x2048xf32>
      %cst = arith.constant dense<0xFF800000> : vector<1x2048xf32>
      %5 = vector.multi_reduction <maximumf>, %4, %cst [1] : vector<1x8x2048xf32> to vector<1x2048xf32>
      %6 = vector.shape_cast %5 : vector<1x2048xf32> to vector<1x1x2048xf32>
      %7 = vector.broadcast %6 : vector<1x1x2048xf32> to vector<1x8x2048xf32>
      %8 = arith.subf %4, %7 : vector<1x8x2048xf32>
      %9 = math.exp %8 : vector<1x8x2048xf32>
      %cst_2 = arith.constant dense<0.000000e+00> : vector<1x2048xf32>
      %10 = vector.multi_reduction <add>, %9, %cst_2 [1] : vector<1x8x2048xf32> to vector<1x2048xf32>
      %11 = vector.shape_cast %10 : vector<1x2048xf32> to vector<1x1x2048xf32>
      %cst_3 = arith.constant 1.000000e+00 : f32
      %12 = vector.broadcast %cst_3 : f32 to vector<1x1x2048xf32>
      %13 = arith.divf %12, %11 : vector<1x1x2048xf32>
      %c0_4 = arith.constant 0 : index
      %c0_5 = arith.constant 0 : index
      %14 = arith.index_cast %2 : i32 to index
      %15 = vector.load %arg2[%c0_4, %c0_5, %14] : memref<1x8x4096xf32, #tpu.memory_space<vmem>>, vector<1x8x2048xf32>
      %16 = arith.mulf %15, %9 : vector<1x8x2048xf32>
      %17 = vector.broadcast %13 : vector<1x1x2048xf32> to vector<1x8x2048xf32>
      %18 = arith.mulf %16, %17 : vector<1x8x2048xf32>
      %19 = arith.addf %15, %18 : vector<1x8x2048xf32>
      %c0_6 = arith.constant 0 : index
      %c0_7 = arith.constant 0 : index
      %20 = arith.index_cast %2 : i32 to index
      %21 = vector.load %arg4[%c0_6, %c0_7, %20] : memref<1x8x4096xf32, #tpu.memory_space<vmem>>, vector<1x8x2048xf32>
      tpu.vector_store %arg4[%c0_6, %c0_7, %20], %19 {strides = array<i32>} : memref<1x8x4096xf32, #tpu.memory_space<vmem>>, vector<1x8x2048xf32>,
    }
    %c2_i32_0 = arith.constant 2 : i32
    return
  }
  func.func @transform_0(%arg0: i32, %arg1: i32) -> (i32, i32, i32) {
    %c0_i32 = arith.constant 0 : i32
    %c0_i32_0 = arith.constant 0 : i32
    return %arg0, %c0_i32, %arg1 : i32, i32, i32
  }
  func.func @transform_1(%arg0: i32, %arg1: i32) -> (i32, i32, i32) {
    %c0_i32 = arith.constant 0 : i32
    %c0_i32_0 = arith.constant 0 : i32
    return %arg0, %c0_i32, %arg1 : i32, i32, i32
  }
  func.func @transform_2(%arg0: i32, %arg1: i32) -> (i32, i32, i32) {
    %c0_i32 = arith.constant 0 : i32
    %c0_i32_0 = arith.constant 0 : i32
    return %arg0, %c0_i32, %arg1 : i32, i32, i32
  }
}

</mosaic_0001>

<llo_original>
// kernel: tpu_custom_call.1
$region0: #{tpu_custom_call.1}
  #allocation0 [shape = 'u32[]', space=smem, size = 0x4, offset = 0x4, fixed_abs, tag = 'smem constant byte address 0x4 - core index']
  #allocation1 [shape = 'u32[144,128]{1,0:T(1,128)}', space=vmem, size = 0x12000, scoped, tag = 'internal scratch']
  %s0 = inlined_call_operand.hbm [shape: f32[2,8,4096], index: 0, kind: input, shape index: {}]
  %s1 = inlined_call_operand.hbm [shape: f32[2,8,4096], index: 1, kind: input, shape index: {}]
  %s2 = inlined_call_operand.hbm [shape: f32[2,8,4096], index: 2, kind: output, shape index: {}]
  %s3 = sld [smem:[#allocation0]]
  $region56: #{tpu_custom_call.1} parent=0
    _
  %s5 = ssub.s32 1, %s3
  %s6 = scalar_select 0, %s5, %s3
  $region1: #{tpu_custom_call.1} parent=0
    #allocation2 [shape = 'u8[262144]{0}', space=vmem, size = 0x40000, scoped, tag = 'input window, operand 0']
    #allocation3 [shape = 's32[2]{0}', space=sflag, size = 0x8, scoped, tag = 'scoped memory for tpu_custom_call.1']
    #allocation4 [shape = 's32[2]{0}', space=sflag, size = 0x8, scoped, tag = 'scoped memory for tpu_custom_call.1']
    #allocation5 [shape = 'u8[262144]{0}', space=vmem, size = 0x40000, scoped, tag = 'input window, operand 1']
    #allocation6 [shape = 's32[2]{0}', space=sflag, size = 0x8, scoped, tag = 'scoped memory for tpu_custom_call.1']
    #allocation7 [shape = 'u8[262144]{0}', space=vmem, size = 0x40000, scoped, tag = 'output window, operand 0']
    %7 = vsyncpa [#allocation3], 0
    %s8 = scalar_lea.sflag [#allocation3], 1
    %9 = vsyncpa %s8, 0
    %10 = vsyncpa [#allocation6], 0
    %s11 = scalar_lea.sflag [#allocation6], 1
    %12 = vsyncpa %s11, 0
    %13 = vsyncpa [#allocation4], 0
    %s14 = scalar_lea.sflag [#allocation4], 1
    %15 = vsyncpa %s14, 0
    loop: start=0, step=1, limit=4
    $region2: #{tpu_custom_call.1} parent=1 // loop_pre_header
      _
    $region3: #{tpu_custom_call.1} parent=1 // loop_header
      %s17 = sphi 0, %s21
      %p18 = scmp.ge.s32.totalorder %s17, 4
      %s24 = sphi 0, %s36
      %s25 = sphi 0, %s32
      %s26 = sphi 0, %s24
      %s27 = sphi 0, %s25
      %s28 = sphi 0, %s26
      %s29 = sphi 0, %s27
      %s41 = sphi 0, %s43
      %s44 = sphi 0, %s41
      %s45 = sphi 0, %s44
      %s61 = sphi 0, %s45
      %s69 = sphi 0, %s71
      %s72 = sphi 0, %s69
      %s73 = sphi 0, %s72
      %s89 = sphi 0, %s73
      %s97 = sphi 0, %s99
      %s100 = sphi 0, %s97
      %s101 = sphi 0, %s100
      %s117 = sphi 0, %s101
    $region4: #{tpu_custom_call.1} parent=1 // loop_header_branch
      %20 = sbr.rel (%p18) target = $region8
    $region5: #{tpu_custom_call.1} parent=1 // loop_body
      %s22 = ssub.s32 %s17, 1
      %s23 = ssub.s32 %s17, 2
      %s30 = sadd.s32 1, %s25
      %p31 = scmp.ge.s32.totalorder %s30, 1
      %s32 = scalar_select %p31, 0, %s30
      %s33 = sadd.s32 1, %s24
      %s34 = scalar_select %p31, %s33, %s24
      %p35 = scmp.ge.s32.totalorder %s34, 2
      %s36 = scalar_select %p35, 0, %s34
      %s37 = ssub.s32 %s24, %s36
      %s38 = ssub.s32 %s25, %s32
      %s39 = sor.u32 %s37, %s38
      %p40 = scmp.eq.s32.totalorder %s39, 0
      %s42 = sadd.s32 %s41, 1
      %s43 = scalar_select %p40, %s41, %s42
      %p46 = pneg %p40
      %p47 = scmp.eq.s32.totalorder %s17, 1
      %p48 = por %p46, %p47
      %p49 = scmp.ne.s32.totalorder %s41, %s44
      %p50 = scmp.eq.s32.totalorder %s17, 0
      %p51 = por %p49, %p50
      %p52 = scmp.ne.s32.totalorder %s41, %s44
      %p53 = scmp.eq.s32.totalorder %s22, 1
      %p54 = por %p52, %p53
      %p55 = scmp.ne.s32.totalorder %s44, %s45
      %p56 = scmp.eq.s32.totalorder %s22, 0
      %p57 = por %p55, %p56
      %p58 = scmp.ne.s32.totalorder %s44, %s45
      %p59 = scmp.eq.s32.totalorder %s23, 1
      %p60 = por %p58, %p59
      %p62 = scmp.ne.s32.totalorder %s45, %s61
      %p63 = scmp.eq.s32.totalorder %s23, 0
      %p64 = por %p62, %p63
      %s65 = ssub.s32 %s24, %s36
      %s66 = ssub.s32 %s25, %s32
      %s67 = sor.u32 %s65, %s66
      %p68 = scmp.eq.s32.totalorder %s67, 0
      %s70 = sadd.s32 %s69, 1
      %s71 = scalar_select %p68, %s69, %s70
      %p74 = pneg %p68
      %p75 = scmp.eq.s32.totalorder %s17, 1
      %p76 = por %p74, %p75
      %p77 = scmp.ne.s32.totalorder %s69, %s72
      %p78 = scmp.eq.s32.totalorder %s17, 0
      %p79 = por %p77, %p78
      %p80 = scmp.ne.s32.totalorder %s69, %s72
      %p81 = scmp.eq.s32.totalorder %s22, 1
      %p82 = por %p80, %p81
      %p83 = scmp.ne.s32.totalorder %s72, %s73
      %p84 = scmp.eq.s32.totalorder %s22, 0
      %p85 = por %p83, %p84
      %p86 = scmp.ne.s32.totalorder %s72, %s73
      %p87 = scmp.eq.s32.totalorder %s23, 1
      %p88 = por %p86, %p87
      %p90 = scmp.ne.s32.totalorder %s73, %s89
      %p91 = scmp.eq.s32.totalorder %s23, 0
      %p92 = por %p90, %p91
      %s93 = ssub.s32 %s24, %s36
      %s94 = ssub.s32 %s25, %s32
      %s95 = sor.u32 %s93, %s94
      %p96 = scmp.eq.s32.totalorder %s95, 0
      %s98 = sadd.s32 %s97, 1
      %s99 = scalar_select %p96, %s97, %s98
      %p102 = pneg %p96
      %p103 = scmp.eq.s32.totalorder %s17, 1
      %p104 = por %p102, %p103
      %p105 = scmp.ne.s32.totalorder %s97, %s100
      %p106 = scmp.eq.s32.totalorder %s17, 0
      %p107 = por %p105, %p106
      %p108 = scmp.ne.s32.totalorder %s97, %s100
      %p109 = scmp.eq.s32.totalorder %s22, 1
      %p110 = por %p108, %p109
      %p111 = scmp.ne.s32.totalorder %s100, %s101
      %p112 = scmp.eq.s32.totalorder %s22, 0
      %p113 = por %p111, %p112
      %p114 = scmp.ne.s32.totalorder %s100, %s101
      %p115 = scmp.eq.s32.totalorder %s23, 1
      %p116 = por %p114, %p115
      %p118 = scmp.ne.s32.totalorder %s101, %s117
      %p119 = scmp.eq.s32.totalorder %s23, 0
      %p120 = por %p118, %p119
      %p121 = scmp.le.s32.totalorder 1, %s17
      %p122 = scmp.lt.s32.totalorder %s17, 3
      %p123 = pnand %p121, %p122
      %p124 = pneg %p123
      // Predicated region
      $region9: #{tpu_custom_call.1} parent=5 // pred_check
        _
      $region10: #{tpu_custom_call.1} parent=5 // pred_check_branch
        %126 = sbr.rel (%p123) target = $region12
      $region11: #{tpu_custom_call.1} parent=5 // pred_region
        %s127 = ssub.s32 %s17, 1
      $region12: #{tpu_custom_call.1} parent=5 // pred_fallthru
        _
      %p128 = scmp.lt.s32.totalorder %s17, 2
      // Predicated region
      $region13: #{tpu_custom_call.1} parent=5 // pred_check
        %p129 = pneg %p128
      $region14: #{tpu_custom_call.1} parent=5 // pred_check_branch
        %131 = sbr.rel (%p129) target = $region16
      $region15: #{tpu_custom_call.1} parent=5 // pred_region
        // Predicated region
        $region17: #{tpu_custom_call.1} parent=15 // pred_check
          %p132 = pneg %p51
        $region18: #{tpu_custom_call.1} parent=15 // pred_check_branch
          %134 = sbr.rel (%p132) target = $region20
        $region19: #{tpu_custom_call.1} parent=15 // pred_region
          %s135 = sand.u32 %s41, 1
          %s136 = scalar_lea.sflag [#allocation3], %s135
          %s137 = sand.u32 %s41, 1
          %s138 = smul.addr %s137, 256
          %s139 = scalar_lea.vmem [#allocation2], %s138
          %s140 = smul.u32 32, %s25
          %s142 = ssub.s32 4096, 4096
          %143 = vsyncadd %s136, %s142
          %s144 = smul.addr %s24, 32
          %s145 = sadd.s32 %s140, %s144
          %s146 = smul.addr %s145, 128
          %s147 = scalar_lea.hbm %s0, %s146
          %s149 = sshll.u32 %s139, 4
          %s150 = int_to_ptr.vmem [resolvable:$true] %s149
          %152 = dma.hbm_to_vmem [thread:$0]  %s147, 4096, %s150, %s136
        $region20: #{tpu_custom_call.1} parent=15 // pred_fallthru
          _
        // Predicated region
        $region21: #{tpu_custom_call.1} parent=15 // pred_check
          %p153 = pneg %p79
        $region22: #{tpu_custom_call.1} parent=15 // pred_check_branch
          %155 = sbr.rel (%p153) target = $region24
        $region23: #{tpu_custom_call.1} parent=15 // pred_region
          %s156 = sand.u32 %s69, 1
          %s157 = scalar_lea.sflag [#allocation6], %s156
          %s158 = sand.u32 %s69, 1
          %s159 = smul.addr %s158, 256
          %s160 = scalar_lea.vmem [#allocation5], %s159
          %s161 = smul.u32 32, %s25
          %s163 = ssub.s32 4096, 4096
          %164 = vsyncadd %s157, %s163
          %s165 = smul.addr %s24, 32
          %s166 = sadd.s32 %s161, %s165
          %s167 = smul.addr %s166, 128
          %s168 = scalar_lea.hbm %s1, %s167
          %s170 = sshll.u32 %s160, 4
          %s171 = int_to_ptr.vmem [resolvable:$true] %s170
          %173 = dma.hbm_to_vmem [thread:$0]  %s168, 4096, %s171, %s157
        $region24: #{tpu_custom_call.1} parent=15 // pred_fallthru
          _
      $region16: #{tpu_custom_call.1} parent=5 // pred_fallthru
        _
      %p174 = scmp.le.s32.totalorder 1, %s17
      %p175 = scmp.lt.s32.totalorder %s17, 3
      %p176 = pnand %p174, %p175
      %p177 = pneg %p176
      // Predicated region
      $region25: #{tpu_custom_call.1} parent=5 // pred_check
        _
      $region26: #{tpu_custom_call.1} parent=5 // pred_check_branch
        %179 = sbr.rel (%p176) target = $region28
      $region27: #{tpu_custom_call.1} parent=5 // pred_region
        %s180 = ssub.s32 %s17, 1
        %s181 = sand.u32 %s44, 1
        %s182 = scalar_lea.sflag [#allocation3], %s181
        %s183 = sand.u32 %s44, 1
        %s184 = smul.addr %s183, 256
        %s185 = scalar_lea.vmem [#allocation2], %s184
        // Predicated region
        $region29: #{tpu_custom_call.1} parent=27 // pred_check
          %p186 = pneg %p57
        $region30: #{tpu_custom_call.1} parent=27 // pred_check_branch
          %188 = sbr.rel (%p186) target = $region32
        $region31: #{tpu_custom_call.1} parent=27 // pred_region
          %189 = dma.done %s182, 4096
        $region32: #{tpu_custom_call.1} parent=27 // pred_fallthru
          _
        %s190 = sand.u32 %s72, 1
        %s191 = scalar_lea.sflag [#allocation6], %s190
        %s192 = sand.u32 %s72, 1
        %s193 = smul.addr %s192, 256
        %s194 = scalar_lea.vmem [#allocation5], %s193
        // Predicated region
        $region33: #{tpu_custom_call.1} parent=27 // pred_check
          %p195 = pneg %p85
        $region34: #{tpu_custom_call.1} parent=27 // pred_check_branch
          %197 = sbr.rel (%p195) target = $region36
        $region35: #{tpu_custom_call.1} parent=27 // pred_region
          %198 = dma.done %s191, 4096
        $region36: #{tpu_custom_call.1} parent=27 // pred_fallthru
          _
        %s199 = sand.u32 %s44, 1
        %s200 = scalar_lea.sflag [#allocation3], %s199
        %s201 = sand.u32 %s44, 1
        %s202 = smul.addr %s201, 256
        %s203 = scalar_lea.vmem [#allocation2], %s202
        %p204 = pneg %p57
        %p205 = pneg %p54
        %s206 = sand.u32 %s72, 1
        %s207 = scalar_lea.sflag [#allocation6], %s206
        %s208 = sand.u32 %s72, 1
        %s209 = smul.addr %s208, 256
        %s210 = scalar_lea.vmem [#allocation5], %s209
        %p211 = pneg %p85
        %p212 = pneg %p82
        %p213 = pneg %p113
        %p214 = pneg %p110
        %s215 = sand.u32 %s100, 1
        %s216 = scalar_lea.sflag [#allocation4], %s215
        %s217 = sand.u32 %s100, 1
        %s218 = smul.addr %s217, 256
        %s219 = scalar_lea.vmem [#allocation7], %s218
        %s220 = smul.u32 32, %s27
        %s221 = smul.u32 32, %s27
        %s222 = smul.u32 32, %s27
        loop: start=0, step=1, limit=2
        $region37: #{tpu_custom_call.1} parent=27 // loop_pre_header
          _
        $region38: #{tpu_custom_call.1} parent=27 // loop_header
          %s224 = sphi 0, %s228
          %p225 = scmp.ge.s32.totalorder %s224, 2
        $region39: #{tpu_custom_call.1} parent=27 // loop_header_branch
          %227 = sbr.rel (%p225) target = $region43
        $region40: #{tpu_custom_call.1} parent=27 // loop_body
          %s229 = smul.u32 %s224, 2048
          %s230 = sshra.s32 %s229, 7
          %s231 = sand.u32 %s229, 127
          %s232 = smul.addr %s230, 8
          %s233 = scalar_lea.vmem %s194, %s232 [#allocation5]
          %v234 = vld [vmem:[%s233] sm:$0xff]
          %v235 = vld [vmem:[%s233 + $0x8] sm:$0xff]
          %v236 = vld [vmem:[%s233 + $0x10] sm:$0xff]
          %v237 = vld [vmem:[%s233 + $0x18] sm:$0xff]
          %v238 = vld [vmem:[%s233 + $0x20] sm:$0xff]
          %v239 = vld [vmem:[%s233 + $0x28] sm:$0xff]
          %v240 = vld [vmem:[%s233 + $0x30] sm:$0xff]
          %v241 = vld [vmem:[%s233 + $0x38] sm:$0xff]
          %v242 = vld [vmem:[%s233 + $0x40] sm:$0xff]
          %v243 = vld [vmem:[%s233 + $0x48] sm:$0xff]
          %v244 = vld [vmem:[%s233 + $0x50] sm:$0xff]
          %v245 = vld [vmem:[%s233 + $0x58] sm:$0xff]
          %v246 = vld [vmem:[%s233 + $0x60] sm:$0xff]
          %v247 = vld [vmem:[%s233 + $0x68] sm:$0xff]
          %v248 = vld [vmem:[%s233 + $0x70] sm:$0xff]
          %v249 = vld [vmem:[%s233 + $0x78] sm:$0xff]
          %v250 = vrot.slane %v234, 4
          %v251 = vmax.f32 %v234, %v250
          %v252 = vrot.slane %v251, 2
          %v253 = vmax.f32 %v251, %v252
          %v254 = vrot.slane %v253, 1
          %v255 = vmax.f32 %v253, %v254
          %v256 = vrot.slane %v235, 4
          %v257 = vmax.f32 %v235, %v256
          %v258 = vrot.slane %v257, 2
          %v259 = vmax.f32 %v257, %v258
          %v260 = vrot.slane %v259, 1
          %v261 = vmax.f32 %v259, %v260
          %v262 = vrot.slane %v236, 4
          %v263 = vmax.f32 %v236, %v262
          %v264 = vrot.slane %v263, 2
          %v265 = vmax.f32 %v263, %v264
          %v266 = vrot.slane %v265, 1
          %v267 = vmax.f32 %v265, %v266
          %v268 = vrot.slane %v237, 4
          %v269 = vmax.f32 %v237, %v268
          %v270 = vrot.slane %v269, 2
          %v271 = vmax.f32 %v269, %v270
          %v272 = vrot.slane %v271, 1
          %v273 = vmax.f32 %v271, %v272
          %v274 = vrot.slane %v238, 4
          %v275 = vmax.f32 %v238, %v274
          %v276 = vrot.slane %v275, 2
          %v277 = vmax.f32 %v275, %v276
          %v278 = vrot.slane %v277, 1
          %v279 = vmax.f32 %v277, %v278
          %v280 = vrot.slane %v239, 4
          %v281 = vmax.f32 %v239, %v280
          %v282 = vrot.slane %v281, 2
          %v283 = vmax.f32 %v281, %v282
          %v284 = vrot.slane %v283, 1
          %v285 = vmax.f32 %v283, %v284
          %v286 = vrot.slane %v240, 4
          %v287 = vmax.f32 %v240, %v286
          %v288 = vrot.slane %v287, 2
          %v289 = vmax.f32 %v287, %v288
          %v290 = vrot.slane %v289, 1
          %v291 = vmax.f32 %v289, %v290
          %v292 = vrot.slane %v241, 4
          %v293 = vmax.f32 %v241, %v292
          %v294 = vrot.slane %v293, 2
          %v295 = vmax.f32 %v293, %v294
          %v296 = vrot.slane %v295, 1
          %v297 = vmax.f32 %v295, %v296
          %v298 = vrot.slane %v242, 4
          %v299 = vmax.f32 %v242, %v298
          %v300 = vrot.slane %v299, 2
          %v301 = vmax.f32 %v299, %v300
          %v302 = vrot.slane %v301, 1
          %v303 = vmax.f32 %v301, %v302
          %v304 = vrot.slane %v243, 4
          %v305 = vmax.f32 %v243, %v304
          %v306 = vrot.slane %v305, 2
          %v307 = vmax.f32 %v305, %v306
          %v308 = vrot.slane %v307, 1
          %v309 = vmax.f32 %v307, %v308
          %v310 = vrot.slane %v244, 4
          %v311 = vmax.f32 %v244, %v310
          %v312 = vrot.slane %v311, 2
          %v313 = vmax.f32 %v311, %v312
          %v314 = vrot.slane %v313, 1
          %v315 = vmax.f32 %v313, %v314
          %v316 = vrot.slane %v245, 4
          %v317 = vmax.f32 %v245, %v316
          %v318 = vrot.slane %v317, 2
          %v319 = vmax.f32 %v317, %v318
          %v320 = vrot.slane %v319, 1
          %v321 = vmax.f32 %v319, %v320
          %v322 = vrot.slane %v246, 4
          %v323 = vmax.f32 %v246, %v322
          %v324 = vrot.slane %v323, 2
          %v325 = vmax.f32 %v323, %v324
          %v326 = vrot.slane %v325, 1
          %v327 = vmax.f32 %v325, %v326
          %v328 = vrot.slane %v247, 4
          %v329 = vmax.f32 %v247, %v328
          %v330 = vrot.slane %v329, 2
          %v331 = vmax.f32 %v329, %v330
          %v332 = vrot.slane %v331, 1
          %v333 = vmax.f32 %v331, %v332
          %v334 = vrot.slane %v248, 4
          %v335 = vmax.f32 %v248, %v334
          %v336 = vrot.slane %v335, 2
          %v337 = vmax.f32 %v335, %v336
          %v338 = vrot.slane %v337, 1
          %v339 = vmax.f32 %v337, %v338
          %v340 = vrot.slane %v249, 4
          %v341 = vmax.f32 %v249, %v340
          %v342 = vrot.slane %v341, 2
          %v343 = vmax.f32 %v341, %v342
          %v344 = vrot.slane %v343, 1
          %v345 = vmax.f32 %v343, %v344
          %v346 = vsub.f32 %v234, %v255
          %v347 = vsub.f32 %v235, %v261
          %v348 = vsub.f32 %v236, %v267
          %v349 = vsub.f32 %v237, %v273
          %v350 = vsub.f32 %v238, %v279
          %v351 = vsub.f32 %v239, %v285
          %v352 = vsub.f32 %v240, %v291
          %v353 = vsub.f32 %v241, %v297
          %v354 = vsub.f32 %v242, %v303
          %v355 = vsub.f32 %v243, %v309
          %v356 = vsub.f32 %v244, %v315
          %v357 = vsub.f32 %v245, %v321
          %v358 = vsub.f32 %v246, %v327
          %v359 = vsub.f32 %v247, %v333
          %v360 = vsub.f32 %v248, %v339
          %v361 = vsub.f32 %v249, %v345
          %v362 = vmul.f32 %v346, 1.442695
          %v363 = vpow.pop %v362
          %v364 = vmul.f32 %v347, 1.442695
          %v365 = vpow.pop %v364
          %v366 = vmul.f32 %v348, 1.442695
          %v367 = vpow.pop %v366
          %v368 = vmul.f32 %v349, 1.442695
          %v369 = vpow.pop %v368
          %v370 = vmul.f32 %v350, 1.442695
          %v371 = vpow.pop %v370
          %v372 = vmul.f32 %v351, 1.442695
          %v373 = vpow.pop %v372
          %v374 = vmul.f32 %v352, 1.442695
          %v375 = vpow.pop %v374
          %v376 = vmul.f32 %v353, 1.442695
          %v377 = vpow.pop %v376
          %v378 = vmul.f32 %v354, 1.442695
          %v379 = vpow.pop %v378
          %v380 = vmul.f32 %v355, 1.442695
          %v381 = vpow.pop %v380
          %v382 = vmul.f32 %v356, 1.442695
          %v383 = vpow.pop %v382
          %v384 = vmul.f32 %v357, 1.442695
          %v385 = vpow.pop %v384
          %v386 = vmul.f32 %v358, 1.442695
          %v387 = vpow.pop %v386
          %v388 = vmul.f32 %v359, 1.442695
          %v389 = vpow.pop %v388
          %v390 = vmul.f32 %v360, 1.442695
          %v391 = vpow.pop %v390
          %v392 = vmul.f32 %v361, 1.442695
          %v393 = vpow.pop %v392
          %v394 = vrot.slane %v363, 4
          %v395 = vadd.f32 %v363, %v394
          %v396 = vrot.slane %v395, 2
          %v397 = vadd.f32 %v395, %v396
          %v398 = vrot.slane %v397, 1
          %v399 = vadd.f32 %v397, %v398
          %v400 = vrot.slane %v365, 4
          %v401 = vadd.f32 %v365, %v400
          %v402 = vrot.slane %v401, 2
          %v403 = vadd.f32 %v401, %v402
          %v404 = vrot.slane %v403, 1
          %v405 = vadd.f32 %v403, %v404
          %v406 = vrot.slane %v367, 4
          %v407 = vadd.f32 %v367, %v406
          %v408 = vrot.slane %v407, 2
          %v409 = vadd.f32 %v407, %v408
          %v410 = vrot.slane %v409, 1
          %v411 = vadd.f32 %v409, %v410
          %v412 = vrot.slane %v369, 4
          %v413 = vadd.f32 %v369, %v412
          %v414 = vrot.slane %v413, 2
          %v415 = vadd.f32 %v413, %v414
          %v416 = vrot.slane %v415, 1
          %v417 = vadd.f32 %v415, %v416
          %v418 = vrot.slane %v371, 4
          %v419 = vadd.f32 %v371, %v418
          %v420 = vrot.slane %v419, 2
          %v421 = vadd.f32 %v419, %v420
          %v422 = vrot.slane %v421, 1
          %v423 = vadd.f32 %v421, %v422
          %v424 = vrot.slane %v373, 4
          %v425 = vadd.f32 %v373, %v424
          %v426 = vrot.slane %v425, 2
          %v427 = vadd.f32 %v425, %v426
          %v428 = vrot.slane %v427, 1
          %v429 = vadd.f32 %v427, %v428
          %v430 = vrot.slane %v375, 4
          %v431 = vadd.f32 %v375, %v430
          %v432 = vrot.slane %v431, 2
          %v433 = vadd.f32 %v431, %v432
          %v434 = vrot.slane %v433, 1
          %v435 = vadd.f32 %v433, %v434
          %v436 = vrot.slane %v377, 4
          %v437 = vadd.f32 %v377, %v436
          %v438 = vrot.slane %v437, 2
          %v439 = vadd.f32 %v437, %v438
          %v440 = vrot.slane %v439, 1
          %v441 = vadd.f32 %v439, %v440
          %v442 = vrot.slane %v379, 4
          %v443 = vadd.f32 %v379, %v442
          %v444 = vrot.slane %v443, 2
          %v445 = vadd.f32 %v443, %v444
          %v446 = vrot.slane %v445, 1
          %v447 = vadd.f32 %v445, %v446
          %v448 = vrot.slane %v381, 4
          %v449 = vadd.f32 %v381, %v448
          %v450 = vrot.slane %v449, 2
          %v451 = vadd.f32 %v449, %v450
          %v452 = vrot.slane %v451, 1
          %v453 = vadd.f32 %v451, %v452
          %v454 = vrot.slane %v383, 4
          %v455 = vadd.f32 %v383, %v454
          %v456 = vrot.slane %v455, 2
          %v457 = vadd.f32 %v455, %v456
          %v458 = vrot.slane %v457, 1
          %v459 = vadd.f32 %v457, %v458
          %v460 = vrot.slane %v385, 4
          %v461 = vadd.f32 %v385, %v460
          %v462 = vrot.slane %v461, 2
          %v463 = vadd.f32 %v461, %v462
          %v464 = vrot.slane %v463, 1
          %v465 = vadd.f32 %v463, %v464
          %v466 = vrot.slane %v387, 4
          %v467 = vadd.f32 %v387, %v466
          %v468 = vrot.slane %v467, 2
          %v469 = vadd.f32 %v467, %v468
          %v470 = vrot.slane %v469, 1
          %v471 = vadd.f32 %v469, %v470
          %v472 = vrot.slane %v389, 4
          %v473 = vadd.f32 %v389, %v472
          %v474 = vrot.slane %v473, 2
          %v475 = vadd.f32 %v473, %v474
          %v476 = vrot.slane %v475, 1
          %v477 = vadd.f32 %v475, %v476
          %v478 = vrot.slane %v391, 4
          %v479 = vadd.f32 %v391, %v478
          %v480 = vrot.slane %v479, 2
          %v481 = vadd.f32 %v479, %v480
          %v482 = vrot.slane %v481, 1
          %v483 = vadd.f32 %v481, %v482
          %v484 = vrot.slane %v393, 4
          %v485 = vadd.f32 %v393, %v484
          %v486 = vrot.slane %v485, 2
          %v487 = vadd.f32 %v485, %v486
          %v488 = vrot.slane %v487, 1
          %v489 = vadd.f32 %v487, %v488
          %v490 = vrcp.pop %v399
          %v491 = vmul.f32 1.0, %v490
          %v492 = vrcp.pop %v405
          %v493 = vmul.f32 1.0, %v492
          %v494 = vrcp.pop %v411
          %v495 = vmul.f32 1.0, %v494
          %v496 = vrcp.pop %v417
          %v497 = vmul.f32 1.0, %v496
          %v498 = vrcp.pop %v423
          %v499 = vmul.f32 1.0, %v498
          %v500 = vrcp.pop %v429
          %v501 = vmul.f32 1.0, %v500
          %v502 = vrcp.pop %v435
          %v503 = vmul.f32 1.0, %v502
          %v504 = vrcp.pop %v441
          %v505 = vmul.f32 1.0, %v504
          %v506 = vrcp.pop %v447
          %v507 = vmul.f32 1.0, %v506
          %v508 = vrcp.pop %v453
          %v509 = vmul.f32 1.0, %v508
          %v510 = vrcp.pop %v459
          %v511 = vmul.f32 1.0, %v510
          %v512 = vrcp.pop %v465
          %v513 = vmul.f32 1.0, %v512
          %v514 = vrcp.pop %v471
          %v515 = vmul.f32 1.0, %v514
          %v516 = vrcp.pop %v477
          %v517 = vmul.f32 1.0, %v516
          %v518 = vrcp.pop %v483
          %v519 = vmul.f32 1.0, %v518
          %v520 = vrcp.pop %v489
          %v521 = vmul.f32 1.0, %v520
          %s522 = smul.addr %s230, 8
          %s523 = scalar_lea.vmem %s185, %s522 [#allocation2]
          %v524 = vld [vmem:[%s523] sm:$0xff]
          %v525 = vld [vmem:[%s523 + $0x8] sm:$0xff]
          %v526 = vld [vmem:[%s523 + $0x10] sm:$0xff]
          %v527 = vld [vmem:[%s523 + $0x18] sm:$0xff]
          %v528 = vld [vmem:[%s523 + $0x20] sm:$0xff]
          %v529 = vld [vmem:[%s523 + $0x28] sm:$0xff]
          %v530 = vld [vmem:[%s523 + $0x30] sm:$0xff]
          %v531 = vld [vmem:[%s523 + $0x38] sm:$0xff]
          %v532 = vld [vmem:[%s523 + $0x40] sm:$0xff]
          %v533 = vld [vmem:[%s523 + $0x48] sm:$0xff]
          %v534 = vld [vmem:[%s523 + $0x50] sm:$0xff]
          %v535 = vld [vmem:[%s523 + $0x58] sm:$0xff]
          %v536 = vld [vmem:[%s523 + $0x60] sm:$0xff]
          %v537 = vld [vmem:[%s523 + $0x68] sm:$0xff]
          %v538 = vld [vmem:[%s523 + $0x70] sm:$0xff]
          %v539 = vld [vmem:[%s523 + $0x78] sm:$0xff]
          %v540 = vmul.f32 %v524, %v363
          %v541 = vmul.f32 %v525, %v365
          %v542 = vmul.f32 %v526, %v367
          %v543 = vmul.f32 %v527, %v369
          %v544 = vmul.f32 %v528, %v371
          %v545 = vmul.f32 %v529, %v373
          %v546 = vmul.f32 %v530, %v375
          %v547 = vmul.f32 %v531, %v377
          %v548 = vmul.f32 %v532, %v379
          %v549 = vmul.f32 %v533, %v381
          %v550 = vmul.f32 %v534, %v383
          %v551 = vmul.f32 %v535, %v385
          %v552 = vmul.f32 %v536, %v387
          %v553 = vmul.f32 %v537, %v389
          %v554 = vmul.f32 %v538, %v391
          %v555 = vmul.f32 %v539, %v393
          %v556 = vmul.f32 %v540, %v491
          %v557 = vmul.f32 %v541, %v493
          %v558 = vmul.f32 %v542, %v495
          %v559 = vmul.f32 %v543, %v497
          %v560 = vmul.f32 %v544, %v499
          %v561 = vmul.f32 %v545, %v501
          %v562 = vmul.f32 %v546, %v503
          %v563 = vmul.f32 %v547, %v505
          %v564 = vmul.f32 %v548, %v507
          %v565 = vmul.f32 %v549, %v509
          %v566 = vmul.f32 %v550, %v511
          %v567 = vmul.f32 %v551, %v513
          %v568 = vmul.f32 %v552, %v515
          %v569 = vmul.f32 %v553, %v517
          %v570 = vmul.f32 %v554, %v519
          %v571 = vmul.f32 %v555, %v521
          %v572 = vadd.f32 %v524, %v556
          %v573 = vadd.f32 %v525, %v557
          %v574 = vadd.f32 %v526, %v558
          %v575 = vadd.f32 %v527, %v559
          %v576 = vadd.f32 %v528, %v560
          %v577 = vadd.f32 %v529, %v561
          %v578 = vadd.f32 %v530, %v562
          %v579 = vadd.f32 %v531, %v563
          %v580 = vadd.f32 %v532, %v564
          %v581 = vadd.f32 %v533, %v565
          %v582 = vadd.f32 %v534, %v566
          %v583 = vadd.f32 %v535, %v567
          %v584 = vadd.f32 %v536, %v568
          %v585 = vadd.f32 %v537, %v569
          %v586 = vadd.f32 %v538, %v570
          %v587 = vadd.f32 %v539, %v571
          %s588 = smul.addr %s230, 8
          %s589 = scalar_lea.vmem %s219, %s588 [#allocation7]
          %590 = vst [vmem:[%s589] sm:$0xff] %v572
          %591 = vst [vmem:[%s589 + $0x8] sm:$0xff] %v573
          %592 = vst [vmem:[%s589 + $0x10] sm:$0xff] %v574
          %593 = vst [vmem:[%s589 + $0x18] sm:$0xff] %v575
          %594 = vst [vmem:[%s589 + $0x20] sm:$0xff] %v576
          %595 = vst [vmem:[%s589 + $0x28] sm:$0xff] %v577
          %596 = vst [vmem:[%s589 + $0x30] sm:$0xff] %v578
          %597 = vst [vmem:[%s589 + $0x38] sm:$0xff] %v579
          %598 = vst [vmem:[%s589 + $0x40] sm:$0xff] %v580
          %599 = vst [vmem:[%s589 + $0x48] sm:$0xff] %v581
          %600 = vst [vmem:[%s589 + $0x50] sm:$0xff] %v582
          %601 = vst [vmem:[%s589 + $0x58] sm:$0xff] %v583
          %602 = vst [vmem:[%s589 + $0x60] sm:$0xff] %v584
          %603 = vst [vmem:[%s589 + $0x68] sm:$0xff] %v585
          %604 = vst [vmem:[%s589 + $0x70] sm:$0xff] %v586
          %605 = vst [vmem:[%s589 + $0x78] sm:$0xff] %v587
        $region41: #{tpu_custom_call.1} parent=27 // loop_footer
          %s228 = sadd.s32 1, %s224
        $region42: #{tpu_custom_call.1} parent=27 // loop_footer_branch
          %223 = sbr.rel target = $region38
        $region43: #{tpu_custom_call.1} parent=27 // loop_exit
          _
        %s606 = sand.u32 %s100, 1
        %s607 = scalar_lea.sflag [#allocation4], %s606
        %s608 = sand.u32 %s100, 1
        %s609 = smul.addr %s608, 256
        %s610 = scalar_lea.vmem [#allocation7], %s609
        // Predicated region
        $region44: #{tpu_custom_call.1} parent=27 // pred_check
          %p611 = pneg %p110
        $region45: #{tpu_custom_call.1} parent=27 // pred_check_branch
          %613 = sbr.rel (%p611) target = $region47
        $region46: #{tpu_custom_call.1} parent=27 // pred_region
          %s614 = smul.u32 32, %s27
          %s616 = ssub.s32 4096, 4096
          %617 = vsyncadd %s607, %s616
          %s618 = smul.addr %s26, 32
          %s619 = sadd.s32 %s614, %s618
          %s620 = smul.addr %s619, 128
          %s621 = scalar_lea.hbm %s2, %s620
          %s623 = sshll.u32 %s610, 4
          %s624 = int_to_ptr.vmem [resolvable:$true] %s623
          %626 = dma.vmem_to_hbm [thread:$0]  %s624, 4096, %s621, %s607
        $region47: #{tpu_custom_call.1} parent=27 // pred_fallthru
          _
      $region28: #{tpu_custom_call.1} parent=5 // pred_fallthru
        _
      %p627 = scmp.le.s32.totalorder 2, %s17
      // Predicated region
      $region48: #{tpu_custom_call.1} parent=5 // pred_check
        %p628 = pneg %p627
      $region49: #{tpu_custom_call.1} parent=5 // pred_check_branch
        %630 = sbr.rel (%p628) target = $region51
      $region50: #{tpu_custom_call.1} parent=5 // pred_region
        %s631 = ssub.s32 %s17, 2
        // Predicated region
        $region52: #{tpu_custom_call.1} parent=50 // pred_check
          %p632 = pneg %p116
        $region53: #{tpu_custom_call.1} parent=50 // pred_check_branch
          %634 = sbr.rel (%p632) target = $region55
        $region54: #{tpu_custom_call.1} parent=50 // pred_region
          %s635 = sand.u32 %s101, 1
          %s636 = scalar_lea.sflag [#allocation4], %s635
          %s637 = sand.u32 %s101, 1
          %s638 = smul.addr %s637, 256
          %s639 = scalar_lea.vmem [#allocation7], %s638
          %640 = dma.done %s636, 4096
        $region55: #{tpu_custom_call.1} parent=50 // pred_fallthru
          _
      $region51: #{tpu_custom_call.1} parent=5 // pred_fallthru
        _
    $region6: #{tpu_custom_call.1} parent=1 // loop_footer
      %s21 = sadd.s32 1, %s17
    $region7: #{tpu_custom_call.1} parent=1 // loop_footer_branch
      %16 = sbr.rel target = $region3
    $region8: #{tpu_custom_call.1} parent=1 // loop_exit
      _
    %641 = vsyncpa [#allocation3], 1
    %s642 = scalar_lea.sflag [#allocation3], 1
    %643 = vsyncpa %s642, 1
    %644 = vsyncpa [#allocation6], 1
    %s645 = scalar_lea.sflag [#allocation6], 1
    %646 = vsyncpa %s645, 1
    %647 = vsyncpa [#allocation4], 1
    %s648 = scalar_lea.sflag [#allocation4], 1
    %649 = vsyncpa %s648, 1

</llo_original>
